<compile_context>
chip_gen: v6e
topology: v6e:2x2x1
jax: 0.10.0
libtpu: 0.0.40
codegen_flags: <defaults>
</compile_context>

<pallas_src>
import functools

import jax
import jax.numpy as jnp
from jax import lax
from jax.experimental import pallas as pl
from jax.experimental.pallas import tpu as pltpu

_MIN_DEPTH = 0.0001
_EPS = 1e-8
_LANES = 128
_TM_MAX = 1024      # rows per grid step (1024*128*4B = 512 KiB per input block)
_NUM_CORES = 2      # leading "parallel" grid axis (2x on v7x, ~free elsewhere)
_ACC_ROWS = 16      # sublane-padded accumulator rows (9 used)
_BIG = 1e30         # finite sentinel so delta-threshold compares are False


def _metrics_kernel(pt_ref, gt_ref, acc_ref, *, min_depth, max_depth,
                    tm, rows, steps_per_core, needs_bound):
    c = pl.program_id(0)   # core (parallel) axis
    s = pl.program_id(1)   # reduction (arbitrary) axis

    @pl.when(s == 0)
    def _():
        acc_ref[...] = jnp.zeros_like(acc_ref)

    # cast right after load (works unchanged for bf16 inputs)
    pt = pt_ref[...].astype(jnp.float32)
    gt = gt_ref[...].astype(jnp.float32)

    valid = jnp.logical_and(gt > min_depth, gt < max_depth)
    if needs_bound:
        # Partial / duplicated edge blocks contain undefined data -> gate by
        # the global row index.  (The <128-elem tail pad inside a real row has
        # gt == 0 and is already rejected by the depth mask.)
        linear = c * steps_per_core + s
        row_ids = lax.broadcasted_iota(jnp.int32, pt.shape, 0)
        valid = jnp.logical_and(valid, (linear * tm + row_ids) < rows)

    validf = valid.astype(jnp.float32)

    # 2 reciprocals reused everywhere (replaces 5 divisions per element).
    pt_inv = 1.0 / (pt + _EPS)
    gt_inv = 1.0 / (gt + _EPS)

    # mask with selects (never multiply garbage by 0 -> NaN-safe)
    diff = jnp.where(valid, pt - gt, 0.0)
    diff_abs = jnp.abs(diff)
    diff_sqr = diff * diff

    dinv = jnp.where(valid, pt_inv - gt_inv, 0.0)
    dinv_abs = jnp.abs(dinv)
    dinv_sqr = dinv * dinv

    rel = jnp.where(valid, diff_abs * gt_inv, 0.0)

    ratio = jnp.maximum(gt * pt_inv, pt * gt_inv)
    ratio = jnp.where(valid, ratio, jnp.float32(_BIG))
    d1 = (ratio < 1.25).astype(jnp.float32)
    d2 = (ratio < 1.25 ** 2).astype(jnp.float32)
    d3 = (ratio < 1.25 ** 3).astype(jnp.float32)

    # row 0: num_valid, rows 1..8: the 8 metric numerators
    sums = [validf, diff_sqr, diff_abs, dinv_sqr, dinv_abs, rel, d1, d2, d3]

    # Per-lane partial sums only (VPU adds + one sublane reduce per metric per
    # step).  The single cross-lane reduce + divide + sqrt happen once, in the
    # wrapper epilogue.
    row = lax.broadcasted_iota(jnp.int32, (_ACC_ROWS, _LANES), 0)
    acc = acc_ref[...]
    for k, x in enumerate(sums):
        partial = jnp.sum(x, axis=0, keepdims=True)          # (1, 128)
        acc = acc + jnp.where(row == k, partial, 0.0)
    acc_ref[...] = acc


def metrics_pallas(pt, gt, max_depth, min_depth=_MIN_DEPTH):
    """Equivalent of Metrics.forward(pt, gt) -> (1, 8) float32 array."""
    pt_flat = pt.reshape(-1)
    gt_flat = gt.reshape(-1)
    n = pt_flat.shape[0]

    rows = pl.cdiv(n, _LANES)
    pad = rows * _LANES - n
    if pad:
        # only the (<128-element) tail ever gets padded; gt==0 -> masked out
        pt_flat = jnp.pad(pt_flat, (0, pad))
        gt_flat = jnp.pad(gt_flat, (0, pad))
    pt2 = pt_flat.reshape(rows, _LANES)
    gt2 = gt_flat.reshape(rows, _LANES)

    tm = min(_TM_MAX, rows)                       # full extent if small
    total_blocks = pl.cdiv(rows, tm)
    steps_per_core = pl.cdiv(total_blocks, _NUM_CORES)
    needs_bound = (_NUM_CORES * steps_per_core * tm) != rows

    def in_map(c, s):
        # clamp so no fully-out-of-bounds block is ever requested; the
        # in-kernel bound mask zeroes any duplicated / partial block rows
        return (jnp.minimum(c * steps_per_core + s, total_blocks - 1), 0)

    kernel = functools.partial(
        _metrics_kernel,
        min_depth=float(min_depth), max_depth=float(max_depth),
        tm=tm, rows=rows, steps_per_core=steps_per_core,
        needs_bound=needs_bound)

    raw = pl.pallas_call(
        kernel,
        out_shape=jax.ShapeDtypeStruct((_NUM_CORES, _ACC_ROWS, _LANES),
                                       jnp.float32),
        grid_spec=pltpu.PrefetchScalarGridSpec(
            num_scalar_prefetch=0,
            grid=(_NUM_CORES, steps_per_core),
            in_specs=[
                pl.BlockSpec((tm, _LANES), in_map),
                pl.BlockSpec((tm, _LANES), in_map),
            ],
            # one resident accumulator block per core; written back once
            out_specs=pl.BlockSpec((None, _ACC_ROWS, _LANES),
                                   lambda c, s: (c, 0, 0)),
        ),
        compiler_params=pltpu.CompilerParams(
            dimension_semantics=("parallel", "arbitrary"),
            vmem_limit_bytes=48 * 1024 * 1024,
        ),
    )(pt2, gt2)

    # Epilogue (tiny): combine the per-core per-lane partials and finalize.
    totals = jnp.sum(raw, axis=(0, 2))            # (16,)
    num_valid = totals[0]
    denom = num_valid + _EPS
    m = totals[1:9] / denom
    result = jnp.stack([
        jnp.sqrt(jnp.maximum(m[0], 0.0)),  # rmse
        m[1],                              # mae
        jnp.sqrt(jnp.maximum(m[2], 0.0)),  # irmse
        m[3],                              # imae
        m[4],                              # rel
        m[5], m[6], m[7],                  # del_1, del_2, del_3
    ])
    return result[None, :]


def _metrics_reference(pt, gt, max_depth, min_depth=_MIN_DEPTH):
    pt = pt.reshape(-1).astype(jnp.float32)
    gt = gt.reshape(-1).astype(jnp.float32)
    pt_inv = 1.0 / (pt + _EPS)
    gt_inv = 1.0 / (gt + _EPS)
    mask = jnp.logical_and(gt > min_depth, gt < max_depth).astype(jnp.float32)
    nv = mask.sum()
    denom = nv + _EPS
    diff = pt - gt
    rmse = jnp.sqrt(jnp.sum(diff * diff * mask) / denom)
    mae = jnp.sum(jnp.abs(diff) * mask) / denom
    dinv = pt_inv - gt_inv
    irmse = jnp.sqrt(jnp.sum(dinv * dinv * mask) / denom)
    imae = jnp.sum(jnp.abs(dinv) * mask) / denom
    rel = jnp.sum(jnp.abs(diff) / (gt + _EPS) * mask) / denom
    ratio = jnp.maximum(gt / (pt + _EPS), pt / (gt + _EPS))
    d1 = jnp.sum((ratio < 1.25).astype(jnp.float32) * mask) / denom
    d2 = jnp.sum((ratio < 1.25 ** 2).astype(jnp.float32) * mask) / denom
    d3 = jnp.sum((ratio < 1.25 ** 3).astype(jnp.float32) * mask) / denom
    return jnp.stack([rmse, mae, irmse, imae, rel, d1, d2, d3])[None, :]


if __name__ == "__main__":
    key = jax.random.PRNGKey(0)
    k1, k2 = jax.random.split(key)

    max_depth = 10.0  # args['model']['max_depth']
    # NCHW depth maps: batch=2, channels=1, spatial=32
    pt = jax.random.uniform(k1, (2, 1, 32, 32), jnp.float32, 0.0, max_depth)
    # gt spans beyond max_depth and includes zeros so the mask is non-trivial
    gt = jax.random.uniform(k2, (2, 1, 32, 32), jnp.float32, -1.0, max_depth * 1.2)
    gt = jnp.maximum(gt, 0.0)

    result = metrics_pallas(pt, gt, max_depth)
    result = jax.block_until_ready(result)

    ref = _metrics_reference(pt, gt, max_depth)
    assert result.shape == (1, 8)
    assert jnp.allclose(result, ref, rtol=1e-4, atol=1e-3), (result, ref)

    print("KERNEL_OK")
</pallas_src>

<mosaic_0001>
module attributes {stable_mosaic.version = 11 : i64} {
  func.func @_metrics_kernel(%arg0: i32, %arg1: i32, %arg2: memref<16x128xf32, #tpu.memory_space<vmem>>, %arg3: memref<16x128xf32, #tpu.memory_space<vmem>>, %arg4: memref<1x16x128xf32, #tpu.memory_space<vmem>>) attributes {dimension_semantics = [#tpu.dimension_semantics<parallel>, #tpu.dimension_semantics<arbitrary>], iteration_bounds = array<i64: 2, 1>, scalar_prefetch = 0 : i64, scratch_operands = 0 : i64, tpu.core_type = #tpu.core_type<tc>, window_params = [{transform_indices = @transform_0, window_bounds = array<i64: 16, 128>}, {transform_indices = @transform_1, window_bounds = array<i64: 16, 128>}, {transform_indices = @transform_2, window_bounds = array<i64: 1, 16, 128>}]} {
    %c0_i32 = arith.constant 0 : i32
    %0 = arith.cmpi eq, %arg1, %c0_i32 : i32
    %1 = arith.extui %0 : i1 to i32
    %c0_i32_0 = arith.constant 0 : i32
    %2 = arith.cmpi ne, %1, %c0_i32_0 : i32
    scf.if %2 {
      %cst_43 = arith.constant 0.000000e+00 : f32
      %146 = vector.broadcast %cst_43 : f32 to vector<16x128xf32>
      %c0_44 = arith.constant 0 : index
      %c0_45 = arith.constant 0 : index
      %c0_46 = arith.constant 0 : index
      %147 = vector.load %arg4[%c0_44, %c0_45, %c0_46] : memref<1x16x128xf32, #tpu.memory_space<vmem>>, vector<1x16x128xf32>
      %148 = vector.shape_cast %147 : vector<1x16x128xf32> to vector<16x128xf32>
      %149 = vector.shape_cast %146 : vector<16x128xf32> to vector<1x16x128xf32>
      tpu.vector_store %arg4[%c0_44, %c0_45, %c0_46], %149 {strides = array<i32>} : memref<1x16x128xf32, #tpu.memory_space<vmem>>, vector<1x16x128xf32>,
    } else {
    }
    %c0 = arith.constant 0 : index
    %c0_1 = arith.constant 0 : index
    %3 = vector.load %arg2[%c0, %c0_1] : memref<16x128xf32, #tpu.memory_space<vmem>>, vector<16x128xf32>
    %c0_2 = arith.constant 0 : index
    %c0_3 = arith.constant 0 : index
    %4 = vector.load %arg3[%c0_2, %c0_3] : memref<16x128xf32, #tpu.memory_space<vmem>>, vector<16x128xf32>
    %cst = arith.constant 9.99999974E-5 : f32
    %5 = vector.broadcast %cst : f32 to vector<16x128xf32>
    %6 = arith.cmpf ogt, %4, %5 : vector<16x128xf32>
    %cst_4 = arith.constant 1.000000e+01 : f32
    %7 = vector.broadcast %cst_4 : f32 to vector<16x128xf32>
    %8 = arith.cmpf olt, %4, %7 : vector<16x128xf32>
    %9 = arith.andi %6, %8 : vector<16x128xi1>
    %c1_i32 = arith.constant 1 : i32
    %10 = arith.muli %arg0, %c1_i32 : i32
    %11 = arith.addi %10, %arg1 : i32
    %12 = tpu.iota {dimensions = array<i32: 0>} : vector<16x128xi32>
    %c16_i32 = arith.constant 16 : i32
    %13 = arith.muli %11, %c16_i32 : i32
    %14 = vector.broadcast %13 : i32 to vector<16x128xi32>
    %15 = arith.addi %14, %12 : vector<16x128xi32>
    %c16_i32_5 = arith.constant 16 : i32
    %16 = vector.broadcast %c16_i32_5 : i32 to vector<16x128xi32>
    %17 = arith.cmpi slt, %15, %16 : vector<16x128xi32>
    %18 = arith.andi %9, %17 : vector<16x128xi1>
    %19 = arith.extui %18 : vector<16x128xi1> to vector<16x128xi32>
    %20 = arith.sitofp %19 : vector<16x128xi32> to vector<16x128xf32>
    %cst_6 = arith.constant 9.99999993E-9 : f32
    %21 = vector.broadcast %cst_6 : f32 to vector<16x128xf32>
    %22 = arith.addf %3, %21 : vector<16x128xf32>
    %cst_7 = arith.constant 1.000000e+00 : f32
    %23 = vector.broadcast %cst_7 : f32 to vector<16x128xf32>
    %24 = arith.divf %23, %22 : vector<16x128xf32>
    %cst_8 = arith.constant 9.99999993E-9 : f32
    %25 = vector.broadcast %cst_8 : f32 to vector<16x128xf32>
    %26 = arith.addf %4, %25 : vector<16x128xf32>
    %cst_9 = arith.constant 1.000000e+00 : f32
    %27 = vector.broadcast %cst_9 : f32 to vector<16x128xf32>
    %28 = arith.divf %27, %26 : vector<16x128xf32>
    %29 = arith.subf %3, %4 : vector<16x128xf32>
    %cst_10 = arith.constant 0.000000e+00 : f32
    %30 = vector.broadcast %cst_10 : f32 to vector<16x128xf32>
    %31 = arith.select %18, %29, %30 : vector<16x128xi1>, vector<16x128xf32>
    %32 = math.absf %31 : vector<16x128xf32>
    %33 = arith.mulf %31, %31 : vector<16x128xf32>
    %34 = arith.subf %24, %28 : vector<16x128xf32>
    %cst_11 = arith.constant 0.000000e+00 : f32
    %35 = vector.broadcast %cst_11 : f32 to vector<16x128xf32>
    %36 = arith.select %18, %34, %35 : vector<16x128xi1>, vector<16x128xf32>
    %37 = math.absf %36 : vector<16x128xf32>
    %38 = arith.mulf %36, %36 : vector<16x128xf32>
    %39 = arith.mulf %32, %28 : vector<16x128xf32>
    %cst_12 = arith.constant 0.000000e+00 : f32
    %40 = vector.broadcast %cst_12 : f32 to vector<16x128xf32>
    %41 = arith.select %18, %39, %40 : vector<16x128xi1>, vector<16x128xf32>
    %42 = arith.mulf %4, %24 : vector<16x128xf32>
    %43 = arith.mulf %3, %28 : vector<16x128xf32>
    %44 = arith.maximumf %42, %43 : vector<16x128xf32>
    %cst_13 = arith.constant 1.000000e+30 : f32
    %45 = vector.broadcast %cst_13 : f32 to vector<16x128xf32>
    %46 = arith.select %18, %44, %45 : vector<16x128xi1>, vector<16x128xf32>
    %cst_14 = arith.constant 1.250000e+00 : f32
    %47 = vector.broadcast %cst_14 : f32 to vector<16x128xf32>
    %48 = arith.cmpf olt, %46, %47 : vector<16x128xf32>
    %49 = arith.extui %48 : vector<16x128xi1> to vector<16x128xi32>
    %50 = arith.sitofp %49 : vector<16x128xi32> to vector<16x128xf32>
    %cst_15 = arith.constant 1.562500e+00 : f32
    %51 = vector.broadcast %cst_15 : f32 to vector<16x128xf32>
    %52 = arith.cmpf olt, %46, %51 : vector<16x128xf32>
    %53 = arith.extui %52 : vector<16x128xi1> to vector<16x128xi32>
    %54 = arith.sitofp %53 : vector<16x128xi32> to vector<16x128xf32>
    %cst_16 = arith.constant 1.953125 : f32
    %55 = vector.broadcast %cst_16 : f32 to vector<16x128xf32>
    %56 = arith.cmpf olt, %46, %55 : vector<16x128xf32>
    %57 = arith.extui %56 : vector<16x128xi1> to vector<16x128xi32>
    %58 = arith.sitofp %57 : vector<16x128xi32> to vector<16x128xf32>
    %59 = tpu.iota {dimensions = array<i32: 0>} : vector<16x128xi32>
    %c0_17 = arith.constant 0 : index
    %c0_18 = arith.constant 0 : index
    %c0_19 = arith.constant 0 : index
    %60 = vector.load %arg4[%c0_17, %c0_18, %c0_19] : memref<1x16x128xf32, #tpu.memory_space<vmem>>, vector<1x16x128xf32>
    %61 = vector.shape_cast %60 : vector<1x16x128xf32> to vector<16x128xf32>
    %cst_20 = arith.constant dense<0.000000e+00> : vector<128xf32>
    %62 = vector.multi_reduction <add>, %20, %cst_20 [0] : vector<16x128xf32> to vector<128xf32>
    %63 = vector.shape_cast %62 : vector<128xf32> to vector<1x128xf32>
    %c0_i32_21 = arith.constant 0 : i32
    %64 = vector.broadcast %c0_i32_21 : i32 to vector<16x128xi32>
    %65 = arith.cmpi eq, %59, %64 : vector<16x128xi32>
    %cst_22 = arith.constant 0.000000e+00 : f32
    %66 = vector.shape_cast %63 : vector<1x128xf32> to vector<1x128xf32>
    %67 = vector.broadcast %66 : vector<1x128xf32> to vector<16x128xf32>
    %68 = vector.broadcast %cst_22 : f32 to vector<16x128xf32>
    %69 = arith.select %65, %67, %68 : vector<16x128xi1>, vector<16x128xf32>
    %70 = arith.addf %61, %69 : vector<16x128xf32>
    %cst_23 = arith.constant dense<0.000000e+00> : vector<128xf32>
    %71 = vector.multi_reduction <add>, %33, %cst_23 [0] : vector<16x128xf32> to vector<128xf32>
    %72 = vector.shape_cast %71 : vector<128xf32> to vector<1x128xf32>
    %c1_i32_24 = arith.constant 1 : i32
    %73 = vector.broadcast %c1_i32_24 : i32 to vector<16x128xi32>
    %74 = arith.cmpi eq, %59, %73 : vector<16x128xi32>
    %cst_25 = arith.constant 0.000000e+00 : f32
    %75 = vector.shape_cast %72 : vector<1x128xf32> to vector<1x128xf32>
    %76 = vector.broadcast %75 : vector<1x128xf32> to vector<16x128xf32>
    %77 = vector.broadcast %cst_25 : f32 to vector<16x128xf32>
    %78 = arith.select %74, %76, %77 : vector<16x128xi1>, vector<16x128xf32>
    %79 = arith.addf %70, %78 : vector<16x128xf32>
    %cst_26 = arith.constant dense<0.000000e+00> : vector<128xf32>
    %80 = vector.multi_reduction <add>, %32, %cst_26 [0] : vector<16x128xf32> to vector<128xf32>
    %81 = vector.shape_cast %80 : vector<128xf32> to vector<1x128xf32>
    %c2_i32 = arith.constant 2 : i32
    %82 = vector.broadcast %c2_i32 : i32 to vector<16x128xi32>
    %83 = arith.cmpi eq, %59, %82 : vector<16x128xi32>
    %cst_27 = arith.constant 0.000000e+00 : f32
    %84 = vector.shape_cast %81 : vector<1x128xf32> to vector<1x128xf32>
    %85 = vector.broadcast %84 : vector<1x128xf32> to vector<16x128xf32>
    %86 = vector.broadcast %cst_27 : f32 to vector<16x128xf32>
    %87 = arith.select %83, %85, %86 : vector<16x128xi1>, vector<16x128xf32>
    %88 = arith.addf %79, %87 : vector<16x128xf32>
    %cst_28 = arith.constant dense<0.000000e+00> : vector<128xf32>
    %89 = vector.multi_reduction <add>, %38, %cst_28 [0] : vector<16x128xf32> to vector<128xf32>
    %90 = vector.shape_cast %89 : vector<128xf32> to vector<1x128xf32>
    %c3_i32 = arith.constant 3 : i32
    %91 = vector.broadcast %c3_i32 : i32 to vector<16x128xi32>
    %92 = arith.cmpi eq, %59, %91 : vector<16x128xi32>
    %cst_29 = arith.constant 0.000000e+00 : f32
    %93 = vector.shape_cast %90 : vector<1x128xf32> to vector<1x128xf32>
    %94 = vector.broadcast %93 : vector<1x128xf32> to vector<16x128xf32>
    %95 = vector.broadcast %cst_29 : f32 to vector<16x128xf32>
    %96 = arith.select %92, %94, %95 : vector<16x128xi1>, vector<16x128xf32>
    %97 = arith.addf %88, %96 : vector<16x128xf32>
    %cst_30 = arith.constant dense<0.000000e+00> : vector<128xf32>
    %98 = vector.multi_reduction <add>, %37, %cst_30 [0] : vector<16x128xf32> to vector<128xf32>
    %99 = vector.shape_cast %98 : vector<128xf32> to vector<1x128xf32>
    %c4_i32 = arith.constant 4 : i32
    %100 = vector.broadcast %c4_i32 : i32 to vector<16x128xi32>
    %101 = arith.cmpi eq, %59, %100 : vector<16x128xi32>
    %cst_31 = arith.constant 0.000000e+00 : f32
    %102 = vector.shape_cast %99 : vector<1x128xf32> to vector<1x128xf32>
    %103 = vector.broadcast %102 : vector<1x128xf32> to vector<16x128xf32>
    %104 = vector.broadcast %cst_31 : f32 to vector<16x128xf32>
    %105 = arith.select %101, %103, %104 : vector<16x128xi1>, vector<16x128xf32>
    %106 = arith.addf %97, %105 : vector<16x128xf32>
    %cst_32 = arith.constant dense<0.000000e+00> : vector<128xf32>
    %107 = vector.multi_reduction <add>, %41, %cst_32 [0] : vector<16x128xf32> to vector<128xf32>
    %108 = vector.shape_cast %107 : vector<128xf32> to vector<1x128xf32>
    %c5_i32 = arith.constant 5 : i32
    %109 = vector.broadcast %c5_i32 : i32 to vector<16x128xi32>
    %110 = arith.cmpi eq, %59, %109 : vector<16x128xi32>
    %cst_33 = arith.constant 0.000000e+00 : f32
    %111 = vector.shape_cast %108 : vector<1x128xf32> to vector<1x128xf32>
    %112 = vector.broadcast %111 : vector<1x128xf32> to vector<16x128xf32>
    %113 = vector.broadcast %cst_33 : f32 to vector<16x128xf32>
    %114 = arith.select %110, %112, %113 : vector<16x128xi1>, vector<16x128xf32>
    %115 = arith.addf %106, %114 : vector<16x128xf32>
    %cst_34 = arith.constant dense<0.000000e+00> : vector<128xf32>
    %116 = vector.multi_reduction <add>, %50, %cst_34 [0] : vector<16x128xf32> to vector<128xf32>
    %117 = vector.shape_cast %116 : vector<128xf32> to vector<1x128xf32>
    %c6_i32 = arith.constant 6 : i32
    %118 = vector.broadcast %c6_i32 : i32 to vector<16x128xi32>
    %119 = arith.cmpi eq, %59, %118 : vector<16x128xi32>
    %cst_35 = arith.constant 0.000000e+00 : f32
    %120 = vector.shape_cast %117 : vector<1x128xf32> to vector<1x128xf32>
    %121 = vector.broadcast %120 : vector<1x128xf32> to vector<16x128xf32>
    %122 = vector.broadcast %cst_35 : f32 to vector<16x128xf32>
    %123 = arith.select %119, %121, %122 : vector<16x128xi1>, vector<16x128xf32>
    %124 = arith.addf %115, %123 : vector<16x128xf32>
    %cst_36 = arith.constant dense<0.000000e+00> : vector<128xf32>
    %125 = vector.multi_reduction <add>, %54, %cst_36 [0] : vector<16x128xf32> to vector<128xf32>
    %126 = vector.shape_cast %125 : vector<128xf32> to vector<1x128xf32>
    %c7_i32 = arith.constant 7 : i32
    %127 = vector.broadcast %c7_i32 : i32 to vector<16x128xi32>
    %128 = arith.cmpi eq, %59, %127 : vector<16x128xi32>
    %cst_37 = arith.constant 0.000000e+00 : f32
    %129 = vector.shape_cast %126 : vector<1x128xf32> to vector<1x128xf32>
    %130 = vector.broadcast %129 : vector<1x128xf32> to vector<16x128xf32>
    %131 = vector.broadcast %cst_37 : f32 to vector<16x128xf32>
    %132 = arith.select %128, %130, %131 : vector<16x128xi1>, vector<16x128xf32>
    %133 = arith.addf %124, %132 : vector<16x128xf32>
    %cst_38 = arith.constant dense<0.000000e+00> : vector<128xf32>
    %134 = vector.multi_reduction <add>, %58, %cst_38 [0] : vector<16x128xf32> to vector<128xf32>
    %135 = vector.shape_cast %134 : vector<128xf32> to vector<1x128xf32>
    %c8_i32 = arith.constant 8 : i32
    %136 = vector.broadcast %c8_i32 : i32 to vector<16x128xi32>
    %137 = arith.cmpi eq, %59, %136 : vector<16x128xi32>
    %cst_39 = arith.constant 0.000000e+00 : f32
    %138 = vector.shape_cast %135 : vector<1x128xf32> to vector<1x128xf32>
    %139 = vector.broadcast %138 : vector<1x128xf32> to vector<16x128xf32>
    %140 = vector.broadcast %cst_39 : f32 to vector<16x128xf32>
    %141 = arith.select %137, %139, %140 : vector<16x128xi1>, vector<16x128xf32>
    %142 = arith.addf %133, %141 : vector<16x128xf32>
    %c0_40 = arith.constant 0 : index
    %c0_41 = arith.constant 0 : index
    %c0_42 = arith.constant 0 : index
    %143 = vector.load %arg4[%c0_40, %c0_41, %c0_42] : memref<1x16x128xf32, #tpu.memory_space<vmem>>, vector<1x16x128xf32>
    %144 = vector.shape_cast %143 : vector<1x16x128xf32> to vector<16x128xf32>
    %145 = vector.shape_cast %142 : vector<16x128xf32> to vector<1x16x128xf32>
    tpu.vector_store %arg4[%c0_40, %c0_41, %c0_42], %145 {strides = array<i32>} : memref<1x16x128xf32, #tpu.memory_space<vmem>>, vector<1x16x128xf32>,
    return
  }
  func.func @transform_0(%arg0: i32, %arg1: i32) -> (i32, i32) {
    %c1_i32 = arith.constant 1 : i32
    %0 = arith.muli %arg0, %c1_i32 : i32
    %1 = arith.addi %0, %arg1 : i32
    %c0_i32 = arith.constant 0 : i32
    %2 = arith.minsi %1, %c0_i32 : i32
    %c0_i32_0 = arith.constant 0 : i32
    %c0_i32_1 = arith.constant 0 : i32
    return %2, %c0_i32_0 : i32, i32
  }
  func.func @transform_1(%arg0: i32, %arg1: i32) -> (i32, i32) {
    %c1_i32 = arith.constant 1 : i32
    %0 = arith.muli %arg0, %c1_i32 : i32
    %1 = arith.addi %0, %arg1 : i32
    %c0_i32 = arith.constant 0 : i32
    %2 = arith.minsi %1, %c0_i32 : i32
    %c0_i32_0 = arith.constant 0 : i32
    %c0_i32_1 = arith.constant 0 : i32
    return %2, %c0_i32_0 : i32, i32
  }
  func.func @transform_2(%arg0: i32, %arg1: i32) -> (i32, i32, i32) {
    %c0_i32 = arith.constant 0 : i32
    %c0_i32_0 = arith.constant 0 : i32
    %c0_i32_1 = arith.constant 0 : i32
    return %arg0, %c0_i32, %c0_i32_0 : i32, i32, i32
  }
}

</mosaic_0001>

<llo_original>
// kernel: tpu_custom_call.1
$region0: #{tpu_custom_call.1}
  #allocation0 [shape = 'u32[]', space=smem, size = 0x4, offset = 0x4, fixed_abs, tag = 'smem constant byte address 0x4 - core index']
  #allocation1 [shape = 'u32[144,128]{1,0:T(1,128)}', space=vmem, size = 0x12000, scoped, tag = 'internal scratch']
  %s0 = inlined_call_operand.hbm [shape: f32[16,128], index: 0, kind: input, shape index: {}]
  %s1 = inlined_call_operand.hbm [shape: f32[16,128], index: 1, kind: input, shape index: {}]
  %s2 = inlined_call_operand.hbm [shape: f32[2,16,128], index: 2, kind: output, shape index: {}]
  %s3 = sld [smem:[#allocation0]]
  $region53: #{tpu_custom_call.1} parent=0
    _
  %s5 = ssub.s32 1, %s3
  %s6 = scalar_select 0, %s5, %s3
  $region1: #{tpu_custom_call.1} parent=0
    #allocation2 [shape = 'u8[16384]{0}', space=vmem, size = 0x4000, scoped, tag = 'input window, operand 0']
    #allocation3 [shape = 's32[2]{0}', space=sflag, size = 0x8, scoped, tag = 'scoped memory for tpu_custom_call.1']
    #allocation4 [shape = 's32[2]{0}', space=sflag, size = 0x8, scoped, tag = 'scoped memory for tpu_custom_call.1']
    #allocation5 [shape = 'u8[16384]{0}', space=vmem, size = 0x4000, scoped, tag = 'input window, operand 1']
    #allocation6 [shape = 's32[2]{0}', space=sflag, size = 0x8, scoped, tag = 'scoped memory for tpu_custom_call.1']
    #allocation7 [shape = 'u8[16384]{0}', space=vmem, size = 0x4000, scoped, tag = 'output window, operand 0']
    %7 = vsyncpa [#allocation3], 0
    %s8 = scalar_lea.sflag [#allocation3], 1
    %9 = vsyncpa %s8, 0
    %10 = vsyncpa [#allocation6], 0
    %s11 = scalar_lea.sflag [#allocation6], 1
    %12 = vsyncpa %s11, 0
    %13 = vsyncpa [#allocation4], 0
    %s14 = scalar_lea.sflag [#allocation4], 1
    %15 = vsyncpa %s14, 0
    loop: start=0, step=1, limit=4
    $region2: #{tpu_custom_call.1} parent=1 // loop_pre_header
      _
    $region3: #{tpu_custom_call.1} parent=1 // loop_header
      %s17 = sphi 0, %s21
      %p18 = scmp.ge.s32.totalorder %s17, 4
      %s24 = sphi 0, %s36
      %s25 = sphi 0, %s32
      %s26 = sphi 0, %s24
      %s27 = sphi 0, %s25
      %s28 = sphi 0, %s26
      %s29 = sphi 0, %s27
      %s45 = sphi 0, %s47
      %s48 = sphi 0, %s45
      %s49 = sphi 0, %s48
      %s65 = sphi 0, %s49
      %s77 = sphi 0, %s79
      %s80 = sphi 0, %s77
      %s81 = sphi 0, %s80
      %s97 = sphi 0, %s81
      %s103 = sphi 0, %s105
      %s106 = sphi 0, %s103
      %s107 = sphi 0, %s106
      %s123 = sphi 0, %s107
    $region4: #{tpu_custom_call.1} parent=1 // loop_header_branch
      %20 = sbr.rel (%p18) target = $region8
    $region5: #{tpu_custom_call.1} parent=1 // loop_body
      %s22 = ssub.s32 %s17, 1
      %s23 = ssub.s32 %s17, 2
      %s30 = sadd.s32 1, %s25
      %p31 = scmp.ge.s32.totalorder %s30, 1
      %s32 = scalar_select %p31, 0, %s30
      %s33 = sadd.s32 1, %s24
      %s34 = scalar_select %p31, %s33, %s24
      %p35 = scmp.ge.s32.totalorder %s34, 2
      %s36 = scalar_select %p35, 0, %s34
      %s37 = sadd.s32 %s24, %s25
      %p38 = scmp.lt.s32.totalorder %s37, 0
      %s39 = scalar_select %p38, %s37, 0
      %s40 = sadd.s32 %s36, %s32
      %p41 = scmp.lt.s32.totalorder %s40, 0
      %s42 = scalar_select %p41, %s40, 0
      %s43 = ssub.s32 %s39, %s42
      %p44 = scmp.eq.s32.totalorder %s43, 0
      %s46 = sadd.s32 %s45, 1
      %s47 = scalar_select %p44, %s45, %s46
      %p50 = pneg %p44
      %p51 = scmp.eq.s32.totalorder %s17, 1
      %p52 = por %p50, %p51
      %p53 = scmp.ne.s32.totalorder %s45, %s48
      %p54 = scmp.eq.s32.totalorder %s17, 0
      %p55 = por %p53, %p54
      %p56 = scmp.ne.s32.totalorder %s45, %s48
      %p57 = scmp.eq.s32.totalorder %s22, 1
      %p58 = por %p56, %p57
      %p59 = scmp.ne.s32.totalorder %s48, %s49
      %p60 = scmp.eq.s32.totalorder %s22, 0
      %p61 = por %p59, %p60
      %p62 = scmp.ne.s32.totalorder %s48, %s49
      %p63 = scmp.eq.s32.totalorder %s23, 1
      %p64 = por %p62, %p63
      %p66 = scmp.ne.s32.totalorder %s49, %s65
      %p67 = scmp.eq.s32.totalorder %s23, 0
      %p68 = por %p66, %p67
      %s69 = sadd.s32 %s24, %s25
      %p70 = scmp.lt.s32.totalorder %s69, 0
      %s71 = scalar_select %p70, %s69, 0
      %s72 = sadd.s32 %s36, %s32
      %p73 = scmp.lt.s32.totalorder %s72, 0
      %s74 = scalar_select %p73, %s72, 0
      %s75 = ssub.s32 %s71, %s74
      %p76 = scmp.eq.s32.totalorder %s75, 0
      %s78 = sadd.s32 %s77, 1
      %s79 = scalar_select %p76, %s77, %s78
      %p82 = pneg %p76
      %p83 = scmp.eq.s32.totalorder %s17, 1
      %p84 = por %p82, %p83
      %p85 = scmp.ne.s32.totalorder %s77, %s80
      %p86 = scmp.eq.s32.totalorder %s17, 0
      %p87 = por %p85, %p86
      %p88 = scmp.ne.s32.totalorder %s77, %s80
      %p89 = scmp.eq.s32.totalorder %s22, 1
      %p90 = por %p88, %p89
      %p91 = scmp.ne.s32.totalorder %s80, %s81
      %p92 = scmp.eq.s32.totalorder %s22, 0
      %p93 = por %p91, %p92
      %p94 = scmp.ne.s32.totalorder %s80, %s81
      %p95 = scmp.eq.s32.totalorder %s23, 1
      %p96 = por %p94, %p95
      %p98 = scmp.ne.s32.totalorder %s81, %s97
      %p99 = scmp.eq.s32.totalorder %s23, 0
      %p100 = por %p98, %p99
      %s101 = ssub.s32 %s24, %s36
      %p102 = scmp.eq.s32.totalorder %s101, 0
      %s104 = sadd.s32 %s103, 1
      %s105 = scalar_select %p102, %s103, %s104
      %p108 = pneg %p102
      %p109 = scmp.eq.s32.totalorder %s17, 1
      %p110 = por %p108, %p109
      %p111 = scmp.ne.s32.totalorder %s103, %s106
      %p112 = scmp.eq.s32.totalorder %s17, 0
      %p113 = por %p111, %p112
      %p114 = scmp.ne.s32.totalorder %s103, %s106
      %p115 = scmp.eq.s32.totalorder %s22, 1
      %p116 = por %p114, %p115
      %p117 = scmp.ne.s32.totalorder %s106, %s107
      %p118 = scmp.eq.s32.totalorder %s22, 0
      %p119 = por %p117, %p118
      %p120 = scmp.ne.s32.totalorder %s106, %s107
      %p121 = scmp.eq.s32.totalorder %s23, 1
      %p122 = por %p120, %p121
      %p124 = scmp.ne.s32.totalorder %s107, %s123
      %p125 = scmp.eq.s32.totalorder %s23, 0
      %p126 = por %p124, %p125
      %p127 = scmp.le.s32.totalorder 1, %s17
      %p128 = scmp.lt.s32.totalorder %s17, 3
      %p129 = pnand %p127, %p128
      %p130 = pneg %p129
      // Predicated region
      $region9: #{tpu_custom_call.1} parent=5 // pred_check
        _
      $region10: #{tpu_custom_call.1} parent=5 // pred_check_branch
        %132 = sbr.rel (%p129) target = $region12
      $region11: #{tpu_custom_call.1} parent=5 // pred_region
        %s133 = ssub.s32 %s17, 1
      $region12: #{tpu_custom_call.1} parent=5 // pred_fallthru
        _
      %p134 = scmp.lt.s32.totalorder %s17, 2
      // Predicated region
      $region13: #{tpu_custom_call.1} parent=5 // pred_check
        %p135 = pneg %p134
      $region14: #{tpu_custom_call.1} parent=5 // pred_check_branch
        %137 = sbr.rel (%p135) target = $region16
      $region15: #{tpu_custom_call.1} parent=5 // pred_region
        // Predicated region
        $region17: #{tpu_custom_call.1} parent=15 // pred_check
          %p138 = pneg %p55
        $region18: #{tpu_custom_call.1} parent=15 // pred_check_branch
          %140 = sbr.rel (%p138) target = $region20
        $region19: #{tpu_custom_call.1} parent=15 // pred_region
          %s141 = sand.u32 %s45, 1
          %s142 = scalar_lea.sflag [#allocation3], %s141
          %s143 = sand.u32 %s45, 1
          %s144 = smul.addr %s143, 16
          %s145 = scalar_lea.vmem [#allocation2], %s144
          %s146 = sadd.s32 %s24, %s25
          %p147 = scmp.lt.s32.totalorder %s146, 0
          %s148 = scalar_select %p147, %s146, 0
          %s149 = smul.u32 2, %s148
          %s151 = ssub.s32 256, 256
          %152 = vsyncadd %s142, %s151
          %s153 = smul.addr %s149, 128
          %s154 = scalar_lea.hbm %s0, %s153
          %s155 = sshll.u32 %s145, 4
          %s156 = int_to_ptr.vmem [resolvable:$true] %s155
          %161 = dma.hbm_to_vmem [thread:$0]  %s154, 256, %s156, %s142, 128, 128, 8
        $region20: #{tpu_custom_call.1} parent=15 // pred_fallthru
          _
        // Predicated region
        $region21: #{tpu_custom_call.1} parent=15 // pred_check
          %p162 = pneg %p87
        $region22: #{tpu_custom_call.1} parent=15 // pred_check_branch
          %164 = sbr.rel (%p162) target = $region24
        $region23: #{tpu_custom_call.1} parent=15 // pred_region
          %s165 = sand.u32 %s77, 1
          %s166 = scalar_lea.sflag [#allocation6], %s165
          %s167 = sand.u32 %s77, 1
          %s168 = smul.addr %s167, 16
          %s169 = scalar_lea.vmem [#allocation5], %s168
          %s170 = sadd.s32 %s24, %s25
          %p171 = scmp.lt.s32.totalorder %s170, 0
          %s172 = scalar_select %p171, %s170, 0
          %s173 = smul.u32 2, %s172
          %s175 = ssub.s32 256, 256
          %176 = vsyncadd %s166, %s175
          %s177 = smul.addr %s173, 128
          %s178 = scalar_lea.hbm %s1, %s177
          %s179 = sshll.u32 %s169, 4
          %s180 = int_to_ptr.vmem [resolvable:$true] %s179
          %185 = dma.hbm_to_vmem [thread:$0]  %s178, 256, %s180, %s166, 128, 128, 8
        $region24: #{tpu_custom_call.1} parent=15 // pred_fallthru
          _
      $region16: #{tpu_custom_call.1} parent=5 // pred_fallthru
        _
      %p186 = scmp.le.s32.totalorder 1, %s17
      %p187 = scmp.lt.s32.totalorder %s17, 3
      %p188 = pnand %p186, %p187
      %p189 = pneg %p188
      // Predicated region
      $region25: #{tpu_custom_call.1} parent=5 // pred_check
        _
      $region26: #{tpu_custom_call.1} parent=5 // pred_check_branch
        %191 = sbr.rel (%p188) target = $region28
      $region27: #{tpu_custom_call.1} parent=5 // pred_region
        %s192 = ssub.s32 %s17, 1
        %s193 = sand.u32 %s48, 1
        %s194 = scalar_lea.sflag [#allocation3], %s193
        %s195 = sand.u32 %s48, 1
        %s196 = smul.addr %s195, 16
        %s197 = scalar_lea.vmem [#allocation2], %s196
        // Predicated region
        $region29: #{tpu_custom_call.1} parent=27 // pred_check
          %p198 = pneg %p61
        $region30: #{tpu_custom_call.1} parent=27 // pred_check_branch
          %200 = sbr.rel (%p198) target = $region32
        $region31: #{tpu_custom_call.1} parent=27 // pred_region
          %201 = dma.done %s194, 256
        $region32: #{tpu_custom_call.1} parent=27 // pred_fallthru
          _
        %s202 = sand.u32 %s80, 1
        %s203 = scalar_lea.sflag [#allocation6], %s202
        %s204 = sand.u32 %s80, 1
        %s205 = smul.addr %s204, 16
        %s206 = scalar_lea.vmem [#allocation5], %s205
        // Predicated region
        $region33: #{tpu_custom_call.1} parent=27 // pred_check
          %p207 = pneg %p93
        $region34: #{tpu_custom_call.1} parent=27 // pred_check_branch
          %209 = sbr.rel (%p207) target = $region36
        $region35: #{tpu_custom_call.1} parent=27 // pred_region
          %210 = dma.done %s203, 256
        $region36: #{tpu_custom_call.1} parent=27 // pred_fallthru
          _
        %s211 = sand.u32 %s48, 1
        %s212 = scalar_lea.sflag [#allocation3], %s211
        %s213 = sand.u32 %s48, 1
        %s214 = smul.addr %s213, 16
        %s215 = scalar_lea.vmem [#allocation2], %s214
        %p216 = pneg %p61
        %p217 = pneg %p58
        %s218 = sand.u32 %s80, 1
        %s219 = scalar_lea.sflag [#allocation6], %s218
        %s220 = sand.u32 %s80, 1
        %s221 = smul.addr %s220, 16
        %s222 = scalar_lea.vmem [#allocation5], %s221
        %p223 = pneg %p93
        %p224 = pneg %p90
        %p225 = pneg %p119
        %p226 = pneg %p116
        %s227 = sand.u32 %s106, 1
        %s228 = scalar_lea.sflag [#allocation4], %s227
        %s229 = sand.u32 %s106, 1
        %s230 = smul.addr %s229, 16
        %s231 = scalar_lea.vmem [#allocation7], %s230
        %s232 = sadd.s32 %s26, %s27
        %p233 = scmp.lt.s32.totalorder %s232, 0
        %s234 = scalar_select %p233, %s232, 0
        %s235 = smul.u32 2, %s234
        %s236 = sadd.s32 %s26, %s27
        %p237 = scmp.lt.s32.totalorder %s236, 0
        %s238 = scalar_select %p237, %s236, 0
        %s239 = smul.u32 2, %s238
        %p240 = scmp.eq.s32.totalorder %s27, 0
        // Predicated region
        $region37: #{tpu_custom_call.1} parent=27 // pred_check
          %p241 = pneg %p240
        $region38: #{tpu_custom_call.1} parent=27 // pred_check_branch
          %243 = sbr.rel (%p241) target = $region40
        $region39: #{tpu_custom_call.1} parent=27 // pred_region
          %244 = vst [vmem:[%s231] sm:$0xff] 0.0
          %245 = vst [vmem:[%s231 + $0x8] sm:$0xff] 0.0
        $region40: #{tpu_custom_call.1} parent=27 // pred_fallthru
          _
        %v246 = vld [vmem:[%s197] sm:$0xff]
        %v247 = vld [vmem:[%s197 + $0x8] sm:$0xff]
        %v248 = vld [vmem:[%s206] sm:$0xff]
        %v249 = vld [vmem:[%s206 + $0x8] sm:$0xff]
        %vm250 = vcmp.gt.f32.partialorder %v248, 0.0001
        %vm251 = vcmp.gt.f32.partialorder %v249, 0.0001
        %vm252 = vcmp.lt.f32.partialorder %v248, 10.0
        %vm253 = vcmp.lt.f32.partialorder %v249, 10.0
        %vm254 = vmand %vm250, %vm252
        %vm255 = vmand %vm251, %vm253
        %s256 = sadd.s32 %s26, %s27
        %v257 = vlaneseq
        %v258 = vshrl.u32 %v257, 7
        %v259 = vadd.s32 %v258, 8
        %s260 = smul.u32 %s256, 16
        %v261 = vstv %s260
        %v262 = vadd.s32 %v261, %v258
        %v263 = vadd.s32 %v261, %v259
        %vm264 = vcmp.lt.s32.totalorder %v262, 16
        %vm265 = vcmp.lt.s32.totalorder %v263, 16
        %vm266 = vmand %vm254, %vm264
        %vm267 = vmand %vm255, %vm265
        %v268 = vsel %vm266, 1, 0
        %v269 = vsel %vm267, 1, 0
        %v270 = vcvt.s32.f32 %v268
        %v271 = vcvt.s32.f32 %v269
        %v272 = vadd.f32 %v246, 1e-08
        %v273 = vadd.f32 %v247, 1e-08
        %v274 = vrcp.pop %v272
        %v275 = vmul.f32 1.0, %v274
        %v276 = vrcp.pop %v273
        %v277 = vmul.f32 1.0, %v276
        %v278 = vadd.f32 %v248, 1e-08
        %v279 = vadd.f32 %v249, 1e-08
        %v280 = vrcp.pop %v278
        %v281 = vmul.f32 1.0, %v280
        %v282 = vrcp.pop %v279
        %v283 = vmul.f32 1.0, %v282
        %v284 = vsub.f32 %v246, %v248
        %v285 = vsub.f32 %v247, %v249
        %v286 = vsel %vm266, %v284, 0.0
        %v287 = vsel %vm267, %v285, 0.0
        %v288 = vand.u32 2147483647, %v286
        %v289 = vand.u32 2147483647, %v287
        %v290 = vmul.f32 %v286, %v286
        %v291 = vmul.f32 %v287, %v287
        %v292 = vsub.f32 %v275, %v281
        %v293 = vsub.f32 %v277, %v283
        %v294 = vsel %vm266, %v292, 0.0
        %v295 = vsel %vm267, %v293, 0.0
        %v296 = vand.u32 2147483647, %v294
        %v297 = vand.u32 2147483647, %v295
        %v298 = vmul.f32 %v294, %v294
        %v299 = vmul.f32 %v295, %v295
        %v300 = vmul.f32 %v288, %v281
        %v301 = vmul.f32 %v289, %v283
        %v302 = vsel %vm266, %v300, 0.0
        %v303 = vsel %vm267, %v301, 0.0
        %v304 = vmul.f32 %v248, %v275
        %v305 = vmul.f32 %v249, %v277
        %v306 = vmul.f32 %v246, %v281
        %v307 = vmul.f32 %v247, %v283
        %v308 = vmax.f32 %v304, %v306
        %v309 = vmax.f32 %v305, %v307
        %v310 = vsel %vm266, %v308, 1e+30
        %v311 = vsel %vm267, %v309, 1e+30
        %vm312 = vcmp.lt.f32.partialorder %v310, 1.25
        %vm313 = vcmp.lt.f32.partialorder %v311, 1.25
        %v314 = vsel %vm312, 1, 0
        %v315 = vsel %vm313, 1, 0
        %v316 = vcvt.s32.f32 %v314
        %v317 = vcvt.s32.f32 %v315
        %vm318 = vcmp.lt.f32.partialorder %v310, 1.5625
        %vm319 = vcmp.lt.f32.partialorder %v311, 1.5625
        %v320 = vsel %vm318, 1, 0
        %v321 = vsel %vm319, 1, 0
        %v322 = vcvt.s32.f32 %v320
        %v323 = vcvt.s32.f32 %v321
        %vm324 = vcmp.lt.f32.partialorder %v310, 1.953125
        %vm325 = vcmp.lt.f32.partialorder %v311, 1.953125
        %v326 = vsel %vm324, 1, 0
        %v327 = vsel %vm325, 1, 0
        %v328 = vcvt.s32.f32 %v326
        %v329 = vcvt.s32.f32 %v327
        %v330 = vld [vmem:[%s231] sm:$0xff]
        %v331 = vld [vmem:[%s231 + $0x8] sm:$0xff]
        %v332 = vadd.f32 %v270, %v271
        %v333 = vrot.slane %v332, 4
        %v334 = vadd.f32 %v332, %v333
        %v335 = vrot.slane %v334, 2
        %v336 = vadd.f32 %v334, %v335
        %v337 = vrot.slane %v336, 1
        %v338 = vadd.f32 %v336, %v337
        %vm339 = vcmp.eq.s32.totalorder %v258, 0
        %vm340 = vcmp.eq.s32.totalorder %v259, 0
        %v341 = vsel %vm339, %v338, 0.0
        %v342 = vsel %vm340, %v338, 0.0
        %v343 = vadd.f32 %v330, %v341
        %v344 = vadd.f32 %v331, %v342
        %v345 = vadd.f32 %v290, %v291
        %v346 = vrot.slane %v345, 4
        %v347 = vadd.f32 %v345, %v346
        %v348 = vrot.slane %v347, 2
        %v349 = vadd.f32 %v347, %v348
        %v350 = vrot.slane %v349, 1
        %v351 = vadd.f32 %v349, %v350
        %vm352 = vcmp.eq.s32.totalorder %v258, 1
        %vm353 = vcmp.eq.s32.totalorder %v259, 1
        %v354 = vsel %vm352, %v351, 0.0
        %v355 = vsel %vm353, %v351, 0.0
        %v356 = vadd.f32 %v343, %v354
        %v357 = vadd.f32 %v344, %v355
        %v358 = vadd.f32 %v288, %v289
        %v359 = vrot.slane %v358, 4
        %v360 = vadd.f32 %v358, %v359
        %v361 = vrot.slane %v360, 2
        %v362 = vadd.f32 %v360, %v361
        %v363 = vrot.slane %v362, 1
        %v364 = vadd.f32 %v362, %v363
        %vm365 = vcmp.eq.s32.totalorder %v258, 2
        %vm366 = vcmp.eq.s32.totalorder %v259, 2
        %v367 = vsel %vm365, %v364, 0.0
        %v368 = vsel %vm366, %v364, 0.0
        %v369 = vadd.f32 %v356, %v367
        %v370 = vadd.f32 %v357, %v368
        %v371 = vadd.f32 %v298, %v299
        %v372 = vrot.slane %v371, 4
        %v373 = vadd.f32 %v371, %v372
        %v374 = vrot.slane %v373, 2
        %v375 = vadd.f32 %v373, %v374
        %v376 = vrot.slane %v375, 1
        %v377 = vadd.f32 %v375, %v376
        %vm378 = vcmp.eq.s32.totalorder %v258, 3
        %vm379 = vcmp.eq.s32.totalorder %v259, 3
        %v380 = vsel %vm378, %v377, 0.0
        %v381 = vsel %vm379, %v377, 0.0
        %v382 = vadd.f32 %v369, %v380
        %v383 = vadd.f32 %v370, %v381
        %v384 = vadd.f32 %v296, %v297
        %v385 = vrot.slane %v384, 4
        %v386 = vadd.f32 %v384, %v385
        %v387 = vrot.slane %v386, 2
        %v388 = vadd.f32 %v386, %v387
        %v389 = vrot.slane %v388, 1
        %v390 = vadd.f32 %v388, %v389
        %vm391 = vcmp.eq.s32.totalorder %v258, 4
        %vm392 = vcmp.eq.s32.totalorder %v259, 4
        %v393 = vsel %vm391, %v390, 0.0
        %v394 = vsel %vm392, %v390, 0.0
        %v395 = vadd.f32 %v382, %v393
        %v396 = vadd.f32 %v383, %v394
        %v397 = vadd.f32 %v302, %v303
        %v398 = vrot.slane %v397, 4
        %v399 = vadd.f32 %v397, %v398
        %v400 = vrot.slane %v399, 2
        %v401 = vadd.f32 %v399, %v400
        %v402 = vrot.slane %v401, 1
        %v403 = vadd.f32 %v401, %v402
        %vm404 = vcmp.eq.s32.totalorder %v258, 5
        %vm405 = vcmp.eq.s32.totalorder %v259, 5
        %v406 = vsel %vm404, %v403, 0.0
        %v407 = vsel %vm405, %v403, 0.0
        %v408 = vadd.f32 %v395, %v406
        %v409 = vadd.f32 %v396, %v407
        %v410 = vadd.f32 %v316, %v317
        %v411 = vrot.slane %v410, 4
        %v412 = vadd.f32 %v410, %v411
        %v413 = vrot.slane %v412, 2
        %v414 = vadd.f32 %v412, %v413
        %v415 = vrot.slane %v414, 1
        %v416 = vadd.f32 %v414, %v415
        %vm417 = vcmp.eq.s32.totalorder %v258, 6
        %vm418 = vcmp.eq.s32.totalorder %v259, 6
        %v419 = vsel %vm417, %v416, 0.0
        %v420 = vsel %vm418, %v416, 0.0
        %v421 = vadd.f32 %v408, %v419
        %v422 = vadd.f32 %v409, %v420
        %v423 = vadd.f32 %v322, %v323
        %v424 = vrot.slane %v423, 4
        %v425 = vadd.f32 %v423, %v424
        %v426 = vrot.slane %v425, 2
        %v427 = vadd.f32 %v425, %v426
        %v428 = vrot.slane %v427, 1
        %v429 = vadd.f32 %v427, %v428
        %vm430 = vcmp.eq.s32.totalorder %v258, 7
        %vm431 = vcmp.eq.s32.totalorder %v259, 7
        %v432 = vsel %vm430, %v429, 0.0
        %v433 = vsel %vm431, %v429, 0.0
        %v434 = vadd.f32 %v421, %v432
        %v435 = vadd.f32 %v422, %v433
        %v436 = vadd.f32 %v328, %v329
        %v437 = vrot.slane %v436, 4
        %v438 = vadd.f32 %v436, %v437
        %v439 = vrot.slane %v438, 2
        %v440 = vadd.f32 %v438, %v439
        %v441 = vrot.slane %v440, 1
        %v442 = vadd.f32 %v440, %v441
        %vm443 = vcmp.eq.s32.totalorder %v258, 8
        %vm444 = vcmp.eq.s32.totalorder %v259, 8
        %v445 = vsel %vm443, %v442, 0.0
        %v446 = vsel %vm444, %v442, 0.0
        %v447 = vadd.f32 %v434, %v445
        %v448 = vadd.f32 %v435, %v446
        %449 = vst [vmem:[%s231] sm:$0xff] %v447
        %450 = vst [vmem:[%s231 + $0x8] sm:$0xff] %v448
        %s451 = sand.u32 %s106, 1
        %s452 = scalar_lea.sflag [#allocation4], %s451
        %s453 = sand.u32 %s106, 1
        %s454 = smul.addr %s453, 16
        %s455 = scalar_lea.vmem [#allocation7], %s454
        // Predicated region
        $region41: #{tpu_custom_call.1} parent=27 // pred_check
          %p456 = pneg %p116
        $region42: #{tpu_custom_call.1} parent=27 // pred_check_branch
          %458 = sbr.rel (%p456) target = $region44
        $region43: #{tpu_custom_call.1} parent=27 // pred_region
          %s460 = ssub.s32 256, 256
          %461 = vsyncadd %s452, %s460
          %s462 = smul.addr %s26, 2
          %s463 = smul.addr %s462, 128
          %s464 = scalar_lea.hbm %s2, %s463
          %s465 = sshll.u32 %s455, 4
          %s466 = int_to_ptr.vmem [resolvable:$true] %s465
          %471 = dma.vmem_to_hbm [thread:$0]  %s466, 256, %s464, %s452, 128, 128, 8
        $region44: #{tpu_custom_call.1} parent=27 // pred_fallthru
          _
      $region28: #{tpu_custom_call.1} parent=5 // pred_fallthru
        _
      %p472 = scmp.le.s32.totalorder 2, %s17
      // Predicated region
      $region45: #{tpu_custom_call.1} parent=5 // pred_check
        %p473 = pneg %p472
      $region46: #{tpu_custom_call.1} parent=5 // pred_check_branch
        %475 = sbr.rel (%p473) target = $region48
      $region47: #{tpu_custom_call.1} parent=5 // pred_region
        %s476 = ssub.s32 %s17, 2
        // Predicated region
        $region49: #{tpu_custom_call.1} parent=47 // pred_check
          %p477 = pneg %p122
        $region50: #{tpu_custom_call.1} parent=47 // pred_check_branch
          %479 = sbr.rel (%p477) target = $region52
        $region51: #{tpu_custom_call.1} parent=47 // pred_region
          %s480 = sand.u32 %s107, 1
          %s481 = scalar_lea.sflag [#allocation4], %s480
          %s482 = sand.u32 %s107, 1
          %s483 = smul.addr %s482, 16
          %s484 = scalar_lea.vmem [#allocation7], %s483
          %485 = dma.done %s481, 256
        $region52: #{tpu_custom_call.1} parent=47 // pred_fallthru
          _
      $region48: #{tpu_custom_call.1} parent=5 // pred_fallthru
        _
    $region6: #{tpu_custom_call.1} parent=1 // loop_footer
      %s21 = sadd.s32 1, %s17
    $region7: #{tpu_custom_call.1} parent=1 // loop_footer_branch
      %16 = sbr.rel target = $region3
    $region8: #{tpu_custom_call.1} parent=1 // loop_exit
      _
    %486 = vsyncpa [#allocation3], 1
    %s487 = scalar_lea.sflag [#allocation3], 1
    %488 = vsyncpa %s487, 1
    %489 = vsyncpa [#allocation6], 1
    %s490 = scalar_lea.sflag [#allocation6], 1
    %491 = vsyncpa %s490, 1
    %492 = vsyncpa [#allocation4], 1
    %s493 = scalar_lea.sflag [#allocation4], 1
    %494 = vsyncpa %s493, 1

</llo_original>
